<compile_context>
chip_gen: v5e
topology: v5e:2x2
jax: 0.10.0
libtpu: 0.0.40
codegen_flags: <defaults>
</compile_context>

<pallas_src>
import functools

import jax
import jax.numpy as jnp
from jax.experimental import pallas as pl
from jax.experimental.pallas import tpu as pltpu

# ----------------------------- problem constants -----------------------------
INPUT_SIZE = 2            # (t, x)
HIDDEN = [32, 32]         # hidden_layers
OUTPUT_SIZE = 8           # [rho, vx, vy, vz, Bx, By, Bz, E]
B_X = 0.75
T_DOMAIN = (0.0, 0.2)     # mesh.t_domain
X_DOMAIN = (0.0, 1.0)     # mesh.x_domain
X_DISC = 0.5              # Brio & Wu discontinuity location
GAMMA = 2.0               # Brio & Wu adiabatic index (for the eos)


def _eos_total_energy(rho, p, vx, vy, vz, bx, by, bz, gamma=GAMMA):
    """eos: pressure -> total energy density (ideal MHD)."""
    return p / (gamma - 1.0) + 0.5 * rho * (vx * vx + vy * vy + vz * vz) \
        + 0.5 * (bx * bx + by * by + bz * bz)


def _brio_wu_states():
    """Deterministic Brio & Wu shock-tube left/right IC state vectors (len 8)."""
    eL = _eos_total_energy(1.0, 1.0, 0.0, 0.0, 0.0, B_X, 1.0, 0.0)
    eR = _eos_total_energy(0.125, 0.1, 0.0, 0.0, 0.0, B_X, -1.0, 0.0)
    left = jnp.array([1.0, 0.0, 0.0, 0.0, B_X, 1.0, 0.0, eL], jnp.float32)
    right = jnp.array([0.125, 0.0, 0.0, 0.0, B_X, -1.0, 0.0, eR], jnp.float32)
    return left, right


def _round_up(a, b):
    return ((a + b - 1) // b) * b


# --------------------------------- kernel ------------------------------------
def _pinn_kernel(inp_ref, w1_ref, b1_ref, w2_ref, b2_ref, wh_ref, bh_ref,
                 icl_ref, icr_ref, out_ref):
    # inp_ref: (2, TN) f32, batch on the lane axis.
    x = inp_ref[...]
    t = x[0:1, :]                                      # (1, TN)
    xs = x[1:2, :]                                     # (1, TN)

    # --- SimplePINN MLP ---
    # Layer 1 (K=2 contraction): two broadcast FMAs on the VPU.
    w1 = w1_ref[...]                                   # (32, 2)
    h = w1[:, 0:1] * t + w1[:, 1:2] * xs + b1_ref[...]  # (32, TN)
    h = jnp.maximum(h, 0.0)                            # ReLU
    # Layer 2: MXU matmul, batch on lanes.
    h = jnp.dot(w2_ref[...], h, preferred_element_type=jnp.float32) + b2_ref[...]
    h = jnp.maximum(h, 0.0)
    # Head (B_x already folded into wh/bh row 4 by the wrapper).
    out = jnp.dot(wh_ref[...], h, preferred_element_type=jnp.float32) + bh_ref[...]
    # out: (OUTPUT_SIZE, TN)

    # --- DirichletPINN.overwrite_ics_and_bcs (upwind_only=True) ---
    is_ic_or_bc = jnp.logical_or(
        t <= T_DOMAIN[0],
        jnp.logical_or(xs <= X_DOMAIN[0], xs >= X_DOMAIN[1]))          # (1, TN)
    ic_state_vec = jnp.where(xs < X_DISC, icl_ref[...], icr_ref[...])  # (8, TN)
    out = jnp.where(is_ic_or_bc, ic_state_vec, out)

    # Single full, lane-dense, unmasked store of the (8, TN) tile.
    out_ref[...] = out


# --------------------------------- wrapper ------------------------------------
@functools.partial(jax.jit, static_argnames=("tile_n",))
def brio_and_wu_pinn_forward(inp, params, tile_n=2048):
    """inp: (N, 2) float32; params: dict of (out,in)/(out,1) weights; -> (N, 8)."""
    n = inp.shape[0]
    # Big lane-dense tiles; pad N to a tile multiple instead of asserting.
    tile = min(tile_n, _round_up(n, 128))
    n_pad = _round_up(n, tile)

    inp = inp.astype(jnp.float32)
    if n_pad != n:
        inp = jnp.pad(inp, ((0, n_pad - n), (0, 0)))
    inp_t = inp.T                                      # (2, n_pad), batch on lanes

    w1, b1 = params["w1"], params["b1"]                # (32, 2), (32, 1)
    w2, b2 = params["w2"], params["b2"]                # (32, 32), (32, 1)
    wh, bh = params["wh"], params["bh"]                # (8, 32), (8, 1)

    # Fold the constant B_x output (state component 4) into the head params.
    # The IC vectors below also carry B_x in slot 4, so the IC/BC overwrite
    # preserves it — this is exactly the torch `cat([..., B_x, ...])` semantics
    # without any extra in-kernel work.
    wh = wh.astype(jnp.float32).at[4, :].set(0.0)
    bh = bh.astype(jnp.float32).at[4, 0].set(B_X)

    ic_left, ic_right = _brio_wu_states()
    ic_left = ic_left.reshape(OUTPUT_SIZE, 1)
    ic_right = ic_right.reshape(OUTPUT_SIZE, 1)

    const0 = lambda i: (0, 0)
    grid_spec = pltpu.PrefetchScalarGridSpec(
        num_scalar_prefetch=0,
        grid=(n_pad // tile,),
        in_specs=[
            pl.BlockSpec((INPUT_SIZE, tile), lambda i: (0, i)),   # streamed input
            pl.BlockSpec(w1.shape, const0),
            pl.BlockSpec(b1.shape, const0),
            pl.BlockSpec(w2.shape, const0),
            pl.BlockSpec(b2.shape, const0),
            pl.BlockSpec(wh.shape, const0),
            pl.BlockSpec(bh.shape, const0),
            pl.BlockSpec(ic_left.shape, const0),
            pl.BlockSpec(ic_right.shape, const0),
        ],
        out_specs=pl.BlockSpec((OUTPUT_SIZE, tile), lambda i: (0, i)),
    )

    weight_bytes = 4 * (w1.size + b1.size + w2.size + b2.size +
                        wh.size + bh.size + ic_left.size + ic_right.size)
    cost = pl.CostEstimate(
        flops=2 * n_pad * (INPUT_SIZE * HIDDEN[0]
                           + HIDDEN[0] * HIDDEN[1]
                           + HIDDEN[1] * OUTPUT_SIZE),
        transcendentals=0,
        bytes_accessed=n_pad * (INPUT_SIZE + OUTPUT_SIZE) * 4 + weight_bytes,
    )

    out_t = pl.pallas_call(
        _pinn_kernel,
        out_shape=jax.ShapeDtypeStruct((OUTPUT_SIZE, n_pad), jnp.float32),
        grid_spec=grid_spec,
        compiler_params=pltpu.CompilerParams(
            dimension_semantics=("parallel",),
            vmem_limit_bytes=32 * 1024 * 1024),
        cost_estimate=cost,
    )(inp_t, w1.astype(jnp.float32), b1.astype(jnp.float32),
      w2.astype(jnp.float32), b2.astype(jnp.float32),
      wh, bh, ic_left, ic_right)

    return out_t.T[:n]


# ------------------------ deterministic parameter init ------------------------
def init_params(key):
    """torch.nn.Linear-style uniform init; weights are (out, in), biases (out, 1)."""
    dims = [INPUT_SIZE] + HIDDEN + [OUTPUT_SIZE]
    names = ["1", "2", "h"]
    ks = jax.random.split(key, 2 * (len(dims) - 1))
    params = {}
    for i, (fin, fout) in enumerate(zip(dims[:-1], dims[1:])):
        bound = float(fin) ** -0.5
        params[f"w{names[i]}"] = jax.random.uniform(
            ks[2 * i], (fout, fin), jnp.float32, -bound, bound)
        params[f"b{names[i]}"] = jax.random.uniform(
            ks[2 * i + 1], (fout, 1), jnp.float32, -bound, bound)
    return params


# ----------------------------- pure-JAX reference ------------------------------
def reference_forward(inp, params):
    h = jnp.maximum(inp @ params["w1"].T + params["b1"].T, 0.0)
    h = jnp.maximum(h @ params["w2"].T + params["b2"].T, 0.0)
    out = h @ params["wh"].T + params["bh"].T
    t = inp[..., 0:1]
    xs = inp[..., 1:2]
    is_bc = (t <= T_DOMAIN[0]) | (xs <= X_DOMAIN[0]) | (xs >= X_DOMAIN[1])
    ic_l, ic_r = _brio_wu_states()
    ic = jnp.where(xs < X_DISC, ic_l[None, :], ic_r[None, :])
    out = jnp.where(is_bc, ic, out)
    bxcol = jnp.full(out.shape[:-1] + (1,), B_X, jnp.float32)
    return jnp.concatenate([out[..., :4], bxcol, out[..., 5:]], axis=-1)


if __name__ == "__main__":
    key = jax.random.PRNGKey(0)
    kp, kt, kx = jax.random.split(key, 3)

    params = init_params(kp)

    N = 256  # number of (t, x) collocation points
    t = jax.random.uniform(kt, (N, 1), jnp.float32, T_DOMAIN[0], T_DOMAIN[1])
    x = jax.random.uniform(kx, (N, 1), jnp.float32, X_DOMAIN[0], X_DOMAIN[1])
    # force a few points onto the IC/BC region so the overwrite path is exercised
    t = t.at[:8, 0].set(0.0)
    x = x.at[8:12, 0].set(0.0)
    x = x.at[12:16, 0].set(1.0)
    inp = jnp.concatenate([t, x], axis=-1)  # (N, 2)

    out = brio_and_wu_pinn_forward(inp, params)
    out = jax.block_until_ready(out)

    ref = reference_forward(inp, params)
    assert out.shape == (N, OUTPUT_SIZE)
    assert jnp.allclose(out, ref, atol=1e-5, rtol=1e-5)

    print("KERNEL_OK")
</pallas_src>

<mosaic_0001>
module attributes {stable_mosaic.version = 11 : i64} {
  func.func @_pinn_kernel(%arg0: i32, %arg1: memref<2x256xf32, #tpu.memory_space<vmem>>, %arg2: memref<32x2xf32, #tpu.memory_space<vmem>>, %arg3: memref<32x1xf32, #tpu.memory_space<vmem>>, %arg4: memref<32x32xf32, #tpu.memory_space<vmem>>, %arg5: memref<32x1xf32, #tpu.memory_space<vmem>>, %arg6: memref<8x32xf32, #tpu.memory_space<vmem>>, %arg7: memref<8x1xf32, #tpu.memory_space<vmem>>, %arg8: memref<8x1xf32, #tpu.memory_space<vmem>>, %arg9: memref<8x1xf32, #tpu.memory_space<vmem>>, %arg10: memref<8x256xf32, #tpu.memory_space<vmem>>) attributes {dimension_semantics = [#tpu.dimension_semantics<parallel>], iteration_bounds = array<i64: 1>, scalar_prefetch = 0 : i64, scratch_operands = 0 : i64, tpu.core_type = #tpu.core_type<tc>, window_params = [{transform_indices = @transform_0, window_bounds = array<i64: 2, 256>}, {pipeline_mode = #tpu.pipeline_mode<synchronous>, transform_indices = @transform_1, window_bounds = array<i64: 32, 2>}, {pipeline_mode = #tpu.pipeline_mode<synchronous>, transform_indices = @transform_2, window_bounds = array<i64: 32, 1>}, {pipeline_mode = #tpu.pipeline_mode<synchronous>, transform_indices = @transform_3, window_bounds = array<i64: 32, 32>}, {pipeline_mode = #tpu.pipeline_mode<synchronous>, transform_indices = @transform_4, window_bounds = array<i64: 32, 1>}, {pipeline_mode = #tpu.pipeline_mode<synchronous>, transform_indices = @transform_5, window_bounds = array<i64: 8, 32>}, {pipeline_mode = #tpu.pipeline_mode<synchronous>, transform_indices = @transform_6, window_bounds = array<i64: 8, 1>}, {pipeline_mode = #tpu.pipeline_mode<synchronous>, transform_indices = @transform_7, window_bounds = array<i64: 8, 1>}, {pipeline_mode = #tpu.pipeline_mode<synchronous>, transform_indices = @transform_8, window_bounds = array<i64: 8, 1>}, {transform_indices = @transform_9, window_bounds = array<i64: 8, 256>}]} {
    %c0 = arith.constant 0 : index
    %c0_0 = arith.constant 0 : index
    %0 = vector.load %arg1[%c0, %c0_0] : memref<2x256xf32, #tpu.memory_space<vmem>>, vector<2x256xf32>
    %1 = vector.extract_strided_slice %0 {offsets = [0, 0], sizes = [1, 256], strides = [1, 1]} : vector<2x256xf32> to vector<1x256xf32>
    %2 = vector.extract_strided_slice %0 {offsets = [1, 0], sizes = [1, 256], strides = [1, 1]} : vector<2x256xf32> to vector<1x256xf32>
    %c0_1 = arith.constant 0 : index
    %c0_2 = arith.constant 0 : index
    %3 = vector.load %arg2[%c0_1, %c0_2] : memref<32x2xf32, #tpu.memory_space<vmem>>, vector<32x2xf32>
    %4 = vector.extract_strided_slice %3 {offsets = [0, 0], sizes = [32, 1], strides = [1, 1]} : vector<32x2xf32> to vector<32x1xf32>
    %5 = vector.broadcast %4 : vector<32x1xf32> to vector<32x256xf32>
    %6 = vector.broadcast %1 : vector<1x256xf32> to vector<32x256xf32>
    %7 = arith.mulf %5, %6 : vector<32x256xf32>
    %8 = vector.extract_strided_slice %3 {offsets = [0, 1], sizes = [32, 1], strides = [1, 1]} : vector<32x2xf32> to vector<32x1xf32>
    %9 = vector.broadcast %8 : vector<32x1xf32> to vector<32x256xf32>
    %10 = vector.broadcast %2 : vector<1x256xf32> to vector<32x256xf32>
    %11 = arith.mulf %9, %10 : vector<32x256xf32>
    %12 = arith.addf %7, %11 : vector<32x256xf32>
    %c0_3 = arith.constant 0 : index
    %c0_4 = arith.constant 0 : index
    %13 = vector.load %arg3[%c0_3, %c0_4] : memref<32x1xf32, #tpu.memory_space<vmem>>, vector<32x1xf32>
    %14 = vector.broadcast %13 : vector<32x1xf32> to vector<32x256xf32>
    %15 = arith.addf %12, %14 : vector<32x256xf32>
    %cst = arith.constant 0.000000e+00 : f32
    %16 = vector.broadcast %cst : f32 to vector<32x256xf32>
    %17 = arith.maximumf %15, %16 : vector<32x256xf32>
    %c0_5 = arith.constant 0 : index
    %c0_6 = arith.constant 0 : index
    %18 = vector.load %arg4[%c0_5, %c0_6] : memref<32x32xf32, #tpu.memory_space<vmem>>, vector<32x32xf32>
    %cst_7 = arith.constant dense<0.000000e+00> : vector<32x256xf32>
    %19 = tpu.matmul %18, %17, %cst_7 {dimension_numbers = #tpu.dot_dimension_numbers<[1], [0], [0], [1], [0, 0, 1, 1], [], []>} : vector<32x32xf32>, vector<32x256xf32>, vector<32x256xf32> -> vector<32x256xf32>
    %c0_8 = arith.constant 0 : index
    %c0_9 = arith.constant 0 : index
    %20 = vector.load %arg5[%c0_8, %c0_9] : memref<32x1xf32, #tpu.memory_space<vmem>>, vector<32x1xf32>
    %21 = vector.broadcast %20 : vector<32x1xf32> to vector<32x256xf32>
    %22 = arith.addf %19, %21 : vector<32x256xf32>
    %cst_10 = arith.constant 0.000000e+00 : f32
    %23 = vector.broadcast %cst_10 : f32 to vector<32x256xf32>
    %24 = arith.maximumf %22, %23 : vector<32x256xf32>
    %c0_11 = arith.constant 0 : index
    %c0_12 = arith.constant 0 : index
    %25 = vector.load %arg6[%c0_11, %c0_12] : memref<8x32xf32, #tpu.memory_space<vmem>>, vector<8x32xf32>
    %cst_13 = arith.constant dense<0.000000e+00> : vector<8x256xf32>
    %26 = tpu.matmul %25, %24, %cst_13 {dimension_numbers = #tpu.dot_dimension_numbers<[1], [0], [0], [1], [0, 0, 1, 1], [], []>} : vector<8x32xf32>, vector<32x256xf32>, vector<8x256xf32> -> vector<8x256xf32>
    %c0_14 = arith.constant 0 : index
    %c0_15 = arith.constant 0 : index
    %27 = vector.load %arg7[%c0_14, %c0_15] : memref<8x1xf32, #tpu.memory_space<vmem>>, vector<8x1xf32>
    %28 = vector.broadcast %27 : vector<8x1xf32> to vector<8x256xf32>
    %29 = arith.addf %26, %28 : vector<8x256xf32>
    %cst_16 = arith.constant 0.000000e+00 : f32
    %30 = vector.broadcast %cst_16 : f32 to vector<1x256xf32>
    %31 = arith.cmpf ole, %1, %30 : vector<1x256xf32>
    %cst_17 = arith.constant 0.000000e+00 : f32
    %32 = vector.broadcast %cst_17 : f32 to vector<1x256xf32>
    %33 = arith.cmpf ole, %2, %32 : vector<1x256xf32>
    %cst_18 = arith.constant 1.000000e+00 : f32
    %34 = vector.broadcast %cst_18 : f32 to vector<1x256xf32>
    %35 = arith.cmpf oge, %2, %34 : vector<1x256xf32>
    %36 = arith.ori %33, %35 : vector<1x256xi1>
    %37 = arith.ori %31, %36 : vector<1x256xi1>
    %cst_19 = arith.constant 5.000000e-01 : f32
    %38 = vector.broadcast %cst_19 : f32 to vector<1x256xf32>
    %39 = arith.cmpf olt, %2, %38 : vector<1x256xf32>
    %c0_20 = arith.constant 0 : index
    %c0_21 = arith.constant 0 : index
    %40 = vector.load %arg8[%c0_20, %c0_21] : memref<8x1xf32, #tpu.memory_space<vmem>>, vector<8x1xf32>
    %c0_22 = arith.constant 0 : index
    %c0_23 = arith.constant 0 : index
    %41 = vector.load %arg9[%c0_22, %c0_23] : memref<8x1xf32, #tpu.memory_space<vmem>>, vector<8x1xf32>
    %42 = vector.shape_cast %39 : vector<1x256xi1> to vector<1x256xi1>
    %43 = vector.broadcast %42 : vector<1x256xi1> to vector<8x256xi1>
    %44 = vector.shape_cast %40 : vector<8x1xf32> to vector<8x1xf32>
    %45 = vector.broadcast %44 : vector<8x1xf32> to vector<8x256xf32>
    %46 = vector.shape_cast %41 : vector<8x1xf32> to vector<8x1xf32>
    %47 = vector.broadcast %46 : vector<8x1xf32> to vector<8x256xf32>
    %48 = arith.select %43, %45, %47 : vector<8x256xi1>, vector<8x256xf32>
    %49 = vector.shape_cast %37 : vector<1x256xi1> to vector<1x256xi1>
    %50 = vector.broadcast %49 : vector<1x256xi1> to vector<8x256xi1>
    %51 = arith.select %50, %48, %29 : vector<8x256xi1>, vector<8x256xf32>
    %c0_24 = arith.constant 0 : index
    %c0_25 = arith.constant 0 : index
    %52 = vector.load %arg10[%c0_24, %c0_25] : memref<8x256xf32, #tpu.memory_space<vmem>>, vector<8x256xf32>
    tpu.vector_store %arg10[%c0_24, %c0_25], %51 {strides = array<i32>} : memref<8x256xf32, #tpu.memory_space<vmem>>, vector<8x256xf32>,
    return
  }
  func.func @transform_0(%arg0: i32) -> (i32, i32) {
    %c0_i32 = arith.constant 0 : i32
    %c0_i32_0 = arith.constant 0 : i32
    return %c0_i32, %arg0 : i32, i32
  }
  func.func @transform_1(%arg0: i32) -> (i32, i32) {
    %c0_i32 = arith.constant 0 : i32
    %c0_i32_0 = arith.constant 0 : i32
    %c0_i32_1 = arith.constant 0 : i32
    return %c0_i32, %c0_i32_0 : i32, i32
  }
  func.func @transform_2(%arg0: i32) -> (i32, i32) {
    %c0_i32 = arith.constant 0 : i32
    %c0_i32_0 = arith.constant 0 : i32
    %c0_i32_1 = arith.constant 0 : i32
    return %c0_i32, %c0_i32_0 : i32, i32
  }
  func.func @transform_3(%arg0: i32) -> (i32, i32) {
    %c0_i32 = arith.constant 0 : i32
    %c0_i32_0 = arith.constant 0 : i32
    %c0_i32_1 = arith.constant 0 : i32
    return %c0_i32, %c0_i32_0 : i32, i32
  }
  func.func @transform_4(%arg0: i32) -> (i32, i32) {
    %c0_i32 = arith.constant 0 : i32
    %c0_i32_0 = arith.constant 0 : i32
    %c0_i32_1 = arith.constant 0 : i32
    return %c0_i32, %c0_i32_0 : i32, i32
  }
  func.func @transform_5(%arg0: i32) -> (i32, i32) {
    %c0_i32 = arith.constant 0 : i32
    %c0_i32_0 = arith.constant 0 : i32
    %c0_i32_1 = arith.constant 0 : i32
    return %c0_i32, %c0_i32_0 : i32, i32
  }
  func.func @transform_6(%arg0: i32) -> (i32, i32) {
    %c0_i32 = arith.constant 0 : i32
    %c0_i32_0 = arith.constant 0 : i32
    %c0_i32_1 = arith.constant 0 : i32
    return %c0_i32, %c0_i32_0 : i32, i32
  }
  func.func @transform_7(%arg0: i32) -> (i32, i32) {
    %c0_i32 = arith.constant 0 : i32
    %c0_i32_0 = arith.constant 0 : i32
    %c0_i32_1 = arith.constant 0 : i32
    return %c0_i32, %c0_i32_0 : i32, i32
  }
  func.func @transform_8(%arg0: i32) -> (i32, i32) {
    %c0_i32 = arith.constant 0 : i32
    %c0_i32_0 = arith.constant 0 : i32
    %c0_i32_1 = arith.constant 0 : i32
    return %c0_i32, %c0_i32_0 : i32, i32
  }
  func.func @transform_9(%arg0: i32) -> (i32, i32) {
    %c0_i32 = arith.constant 0 : i32
    %c0_i32_0 = arith.constant 0 : i32
    return %c0_i32, %arg0 : i32, i32
  }
}

</mosaic_0001>

<llo_original>
// kernel: brio_and_wu_pinn_forward.1
$region0: #{brio_and_wu_pinn_forward.1}
  #allocation0 [shape = 'u32[]', space=smem, size = 0x4, offset = 0x4, fixed_abs, tag = 'smem constant byte address 0x4 - core index']
  #allocation1 [shape = 'u32[72,128]{1,0:T(1,128)}', space=vmem, size = 0x9000, scoped, tag = 'internal scratch']
  %s0 = inlined_call_operand.vmem [shape: f32[2,256], index: 0, kind: input, shape index: {}]
  %s1 = inlined_call_operand.vmem [shape: f32[32,2], index: 1, kind: input, shape index: {}]
  %s2 = inlined_call_operand.vmem [shape: f32[32,1], index: 2, kind: input, shape index: {}]
  %s3 = inlined_call_operand.vmem [shape: f32[32,32], index: 3, kind: input, shape index: {}]
  %s4 = inlined_call_operand.vmem [shape: f32[32,1], index: 4, kind: input, shape index: {}]
  %s5 = inlined_call_operand.vmem [shape: f32[8,32], index: 5, kind: input, shape index: {}]
  %s6 = inlined_call_operand.vmem [shape: f32[8,1], index: 6, kind: input, shape index: {}]
  %s7 = inlined_call_operand.vmem [shape: f32[8,1], index: 7, kind: input, shape index: {}]
  %s8 = inlined_call_operand.vmem [shape: f32[8,1], index: 8, kind: input, shape index: {}]
  %s9 = inlined_call_operand.hbm [shape: f32[8,256], index: 9, kind: output, shape index: {}]
  %s10 = sld [smem:[#allocation0]]
  $region46: #{brio_and_wu_pinn_forward.1} parent=0
    _
  %s12 = ssub.s32 1, %s10
  %s13 = scalar_select 0, %s12, %s10
  $region1: #{brio_and_wu_pinn_forward.1} parent=0
    #allocation2 [shape = 'u8[8192]{0}', space=vmem, size = 0x2000, scoped, tag = 'output window, operand 0, single buffered']
    #allocation3 [shape = 's32[1]{0}', space=sflag, size = 0x4, scoped, tag = 'scoped memory for brio_and_wu_pinn_forward.1']
    %14 = vsyncpa [#allocation3], 0
    // Predicated region
    $region2: #{brio_and_wu_pinn_forward.1} parent=1 // pred_check
      _
    $region3: #{brio_and_wu_pinn_forward.1} parent=1 // pred_check_branch
      %16 = sbr.rel (0) target = $region5
    $region4: #{brio_and_wu_pinn_forward.1} parent=1 // pred_region
      _
    $region5: #{brio_and_wu_pinn_forward.1} parent=1 // pred_fallthru
      _
    // Predicated region
    $region6: #{brio_and_wu_pinn_forward.1} parent=1 // pred_check
      _
    $region7: #{brio_and_wu_pinn_forward.1} parent=1 // pred_check_branch
      %18 = sbr.rel (0) target = $region9
    $region8: #{brio_and_wu_pinn_forward.1} parent=1 // pred_region
      _
    $region9: #{brio_and_wu_pinn_forward.1} parent=1 // pred_fallthru
      _
    // Predicated region
    $region10: #{brio_and_wu_pinn_forward.1} parent=1 // pred_check
      _
    $region11: #{brio_and_wu_pinn_forward.1} parent=1 // pred_check_branch
      %20 = sbr.rel (0) target = $region13
    $region12: #{brio_and_wu_pinn_forward.1} parent=1 // pred_region
      _
    $region13: #{brio_and_wu_pinn_forward.1} parent=1 // pred_fallthru
      _
    // Predicated region
    $region14: #{brio_and_wu_pinn_forward.1} parent=1 // pred_check
      _
    $region15: #{brio_and_wu_pinn_forward.1} parent=1 // pred_check_branch
      %22 = sbr.rel (0) target = $region17
    $region16: #{brio_and_wu_pinn_forward.1} parent=1 // pred_region
      _
    $region17: #{brio_and_wu_pinn_forward.1} parent=1 // pred_fallthru
      _
    // Predicated region
    $region18: #{brio_and_wu_pinn_forward.1} parent=1 // pred_check
      _
    $region19: #{brio_and_wu_pinn_forward.1} parent=1 // pred_check_branch
      %24 = sbr.rel (0) target = $region21
    $region20: #{brio_and_wu_pinn_forward.1} parent=1 // pred_region
      _
    $region21: #{brio_and_wu_pinn_forward.1} parent=1 // pred_fallthru
      _
    // Predicated region
    $region22: #{brio_and_wu_pinn_forward.1} parent=1 // pred_check
      _
    $region23: #{brio_and_wu_pinn_forward.1} parent=1 // pred_check_branch
      %26 = sbr.rel (0) target = $region25
    $region24: #{brio_and_wu_pinn_forward.1} parent=1 // pred_region
      _
    $region25: #{brio_and_wu_pinn_forward.1} parent=1 // pred_fallthru
      _
    // Predicated region
    $region26: #{brio_and_wu_pinn_forward.1} parent=1 // pred_check
      _
    $region27: #{brio_and_wu_pinn_forward.1} parent=1 // pred_check_branch
      %28 = sbr.rel (0) target = $region29
    $region28: #{brio_and_wu_pinn_forward.1} parent=1 // pred_region
      _
    $region29: #{brio_and_wu_pinn_forward.1} parent=1 // pred_fallthru
      _
    // Predicated region
    $region30: #{brio_and_wu_pinn_forward.1} parent=1 // pred_check
      _
    $region31: #{brio_and_wu_pinn_forward.1} parent=1 // pred_check_branch
      %30 = sbr.rel (0) target = $region33
    $region32: #{brio_and_wu_pinn_forward.1} parent=1 // pred_region
      _
    $region33: #{brio_and_wu_pinn_forward.1} parent=1 // pred_fallthru
      _
    // Predicated region
    $region34: #{brio_and_wu_pinn_forward.1} parent=1 // pred_check
      _
    $region35: #{brio_and_wu_pinn_forward.1} parent=1 // pred_check_branch
      %32 = sbr.rel (0) target = $region37
    $region36: #{brio_and_wu_pinn_forward.1} parent=1 // pred_region
      _
    $region37: #{brio_and_wu_pinn_forward.1} parent=1 // pred_fallthru
      _
    %v33 = vld [vmem:[%s0] sm:$0xf]
    %v34 = vld [vmem:[%s1] sm:$0xff]
    %v35 = vld [vmem:[%s1 + $0x8] sm:$0xff]
    %v36 = vld [vmem:[%s1 + $0x10] sm:$0xff]
    %v37 = vld [vmem:[%s1 + $0x18] sm:$0xff]
    %39 = vset.pattern.permute.xlu0 0
    %40 = vperm.xlu0 %39, %v34
    %v41 = vpop.permute.xlu0 %40
    %44 = vset.pattern.permute.xlu0 0
    %45 = vperm.xlu0 %44, %v35
    %v46 = vpop.permute.xlu0 %45
    %49 = vset.pattern.permute.xlu0 0
    %50 = vperm.xlu0 %49, %v36
    %v51 = vpop.permute.xlu0 %50
    %54 = vset.pattern.permute.xlu0 0
    %55 = vperm.xlu0 %54, %v37
    %v56 = vpop.permute.xlu0 %55
    %v59 = vperm.slane %v33, 0
    %v60 = vperm.slane %v33, 2
    %v63 = vperm.slane %v59, 0
    %v64 = vperm.slane %v60, 0
    %v65 = vmul.f32 %v41, %v63
    %v66 = vmul.f32 %v41, %v64
    %v67 = vmul.f32 %v46, %v63
    %v68 = vmul.f32 %v46, %v64
    %v69 = vmul.f32 %v51, %v63
    %v70 = vmul.f32 %v51, %v64
    %v71 = vmul.f32 %v56, %v63
    %v72 = vmul.f32 %v56, %v64
    %73 = vset.pattern.permute.xlu0 1
    %74 = vperm.xlu0 %73, %v34
    %v75 = vpop.permute.xlu0 %74
    %77 = vset.pattern.permute.xlu0 1
    %78 = vperm.xlu0 %77, %v35
    %v79 = vpop.permute.xlu0 %78
    %81 = vset.pattern.permute.xlu0 1
    %82 = vperm.xlu0 %81, %v36
    %v83 = vpop.permute.xlu0 %82
    %85 = vset.pattern.permute.xlu0 1
    %86 = vperm.xlu0 %85, %v37
    %v87 = vpop.permute.xlu0 %86
    %v89 = vperm.slane %v33, 1
    %v90 = vperm.slane %v33, 3
    %v93 = vperm.slane %v89, 1
    %v94 = vperm.slane %v90, 1
    %v95 = vmul.f32 %v75, %v93
    %v96 = vmul.f32 %v75, %v94
    %v97 = vmul.f32 %v79, %v93
    %v98 = vmul.f32 %v79, %v94
    %v99 = vmul.f32 %v83, %v93
    %v100 = vmul.f32 %v83, %v94
    %v101 = vmul.f32 %v87, %v93
    %v102 = vmul.f32 %v87, %v94
    %v103 = vadd.f32 %v65, %v95
    %v104 = vadd.f32 %v66, %v96
    %v105 = vadd.f32 %v67, %v97
    %v106 = vadd.f32 %v68, %v98
    %v107 = vadd.f32 %v69, %v99
    %v108 = vadd.f32 %v70, %v100
    %v109 = vadd.f32 %v71, %v101
    %v110 = vadd.f32 %v72, %v102
    %v111 = vld [vmem:[%s2] sm:$0xff]
    %v112 = vld [vmem:[%s2 + $0x8] sm:$0xff]
    %v113 = vld [vmem:[%s2 + $0x10] sm:$0xff]
    %v114 = vld [vmem:[%s2 + $0x18] sm:$0xff]
    %116 = vset.pattern.permute.xlu0 0
    %117 = vperm.xlu0 %116, %v111
    %v118 = vpop.permute.xlu0 %117
    %121 = vset.pattern.permute.xlu0 0
    %122 = vperm.xlu0 %121, %v112
    %v123 = vpop.permute.xlu0 %122
    %126 = vset.pattern.permute.xlu0 0
    %127 = vperm.xlu0 %126, %v113
    %v128 = vpop.permute.xlu0 %127
    %131 = vset.pattern.permute.xlu0 0
    %132 = vperm.xlu0 %131, %v114
    %v133 = vpop.permute.xlu0 %132
    %v135 = vadd.f32 %v103, %v118
    %v136 = vadd.f32 %v104, %v118
    %v137 = vadd.f32 %v105, %v123
    %v138 = vadd.f32 %v106, %v123
    %v139 = vadd.f32 %v107, %v128
    %v140 = vadd.f32 %v108, %v128
    %v141 = vadd.f32 %v109, %v133
    %v142 = vadd.f32 %v110, %v133
    %v143 = vmax.f32 %v135, 0.0
    %v144 = vmax.f32 %v136, 0.0
    %v145 = vmax.f32 %v137, 0.0
    %v146 = vmax.f32 %v138, 0.0
    %v147 = vmax.f32 %v139, 0.0
    %v148 = vmax.f32 %v140, 0.0
    %v149 = vmax.f32 %v141, 0.0
    %v150 = vmax.f32 %v142, 0.0
    %v151 = vld [vmem:[%s3] sm:$0xff]
    %v152 = vld [vmem:[%s3 + $0x8] sm:$0xff]
    %v153 = vld [vmem:[%s3 + $0x10] sm:$0xff]
    %v154 = vld [vmem:[%s3 + $0x18] sm:$0xff]
    %v155 = vld [vmem:[%s4] sm:$0xff]
    %v156 = vld [vmem:[%s4 + $0x8] sm:$0xff]
    %v157 = vld [vmem:[%s4 + $0x10] sm:$0xff]
    %v158 = vld [vmem:[%s4 + $0x18] sm:$0xff]
    %160 = vset.pattern.permute.xlu0 0
    %161 = vperm.xlu0 %160, %v155
    %v162 = vpop.permute.xlu0 %161
    %165 = vset.pattern.permute.xlu0 0
    %166 = vperm.xlu0 %165, %v156
    %v167 = vpop.permute.xlu0 %166
    %170 = vset.pattern.permute.xlu0 0
    %171 = vperm.xlu0 %170, %v157
    %v172 = vpop.permute.xlu0 %171
    %175 = vset.pattern.permute.xlu0 0
    %176 = vperm.xlu0 %175, %v158
    %v177 = vpop.permute.xlu0 %176
    %vm179 = vcmask 261120
    %v181 = vsel %vm179, %v151, 0
    %v184 = vsel %vm179, %v152, 0
    %v187 = vsel %vm179, %v153, 0
    %v190 = vsel %vm179, %v154, 0
    %192 = vmatpush.msra.mxu0 0.0
    %193 = vmatpush.msra.mxu0 0.0
    %194 = vmatpush.msra.mxu0 0.0
    %195 = vmatpush.msra.mxu0 0.0
    %196 = vmatpush.msra.mxu0 0.0
    %197 = vmatpush.msra.mxu0 0.0
    %198 = vmatpush.msra.mxu0 0.0
    %199 = vmatpush.msra.mxu0 0.0
    %200 = vmatpush.msra.mxu0 0.0
    %201 = vmatpush.msra.mxu0 0.0
    %202 = vmatpush.msra.mxu0 0.0
    %203 = vmatpush.msra.mxu0 0.0
    %204 = vmatpush.msra.mxu0 %v149
    %205 = vmatpush.msra.mxu0 %v147
    %206 = vmatpush.msra.mxu0 %v145
    %207 = vmatpush.msra.mxu0 %v143
    %208 = vmatmul.f32.gmra.mxu0 %v181
    %v209 = vpop.f32.mrf.mxu0
    %v210 = vadd.f32 %v162, %v209
    %211 = vmatmul.f32.gmra.mxu0 %v184
    %v212 = vpop.f32.mrf.mxu0
    %v213 = vadd.f32 %v167, %v212
    %214 = vmatmul.f32.gmra.mxu0 %v187
    %v215 = vpop.f32.mrf.mxu0
    %v216 = vadd.f32 %v172, %v215
    %217 = vmatmul.f32.gmra.mxu0 %v190
    %v218 = vpop.f32.mrf.mxu0
    %v219 = vadd.f32 %v177, %v218
    %220 = vdwg.mxu0
    %221 = vmatpush.msra.mxu0 0.0
    %222 = vmatpush.msra.mxu0 0.0
    %223 = vmatpush.msra.mxu0 0.0
    %224 = vmatpush.msra.mxu0 0.0
    %225 = vmatpush.msra.mxu0 0.0
    %226 = vmatpush.msra.mxu0 0.0
    %227 = vmatpush.msra.mxu0 0.0
    %228 = vmatpush.msra.mxu0 0.0
    %229 = vmatpush.msra.mxu0 0.0
    %230 = vmatpush.msra.mxu0 0.0
    %231 = vmatpush.msra.mxu0 0.0
    %232 = vmatpush.msra.mxu0 0.0
    %233 = vmatpush.msra.mxu0 %v150
    %234 = vmatpush.msra.mxu0 %v148
    %235 = vmatpush.msra.mxu0 %v146
    %236 = vmatpush.msra.mxu0 %v144
    %237 = vmatmul.f32.gmra.mxu0 %v181
    %v238 = vpop.f32.mrf.mxu0
    %v239 = vadd.f32 %v162, %v238
    %240 = vmatmul.f32.gmra.mxu0 %v184
    %v241 = vpop.f32.mrf.mxu0
    %v242 = vadd.f32 %v167, %v241
    %243 = vmatmul.f32.gmra.mxu0 %v187
    %v244 = vpop.f32.mrf.mxu0
    %v245 = vadd.f32 %v172, %v244
    %246 = vmatmul.f32.gmra.mxu0 %v190
    %v247 = vpop.f32.mrf.mxu0
    %v248 = vadd.f32 %v177, %v247
    %249 = vdwg.mxu0
    %v250 = vmax.f32 %v210, 0.0
    %v251 = vmax.f32 %v239, 0.0
    %v252 = vmax.f32 %v213, 0.0
    %v253 = vmax.f32 %v242, 0.0
    %v254 = vmax.f32 %v216, 0.0
    %v255 = vmax.f32 %v245, 0.0
    %v256 = vmax.f32 %v219, 0.0
    %v257 = vmax.f32 %v248, 0.0
    %v258 = vld [vmem:[%s5] sm:$0xff]
    %v259 = vld [vmem:[%s6] sm:$0xff]
    %261 = vset.pattern.permute.xlu0 0
    %262 = vperm.xlu0 %261, %v259
    %v263 = vpop.permute.xlu0 %262
    %v266 = vsel %vm179, %v258, 0
    %268 = vmatpush.msra.mxu0 0.0
    %269 = vmatpush.msra.mxu0 0.0
    %270 = vmatpush.msra.mxu0 0.0
    %271 = vmatpush.msra.mxu0 0.0
    %272 = vmatpush.msra.mxu0 0.0
    %273 = vmatpush.msra.mxu0 0.0
    %274 = vmatpush.msra.mxu0 0.0
    %275 = vmatpush.msra.mxu0 0.0
    %276 = vmatpush.msra.mxu0 0.0
    %277 = vmatpush.msra.mxu0 0.0
    %278 = vmatpush.msra.mxu0 0.0
    %279 = vmatpush.msra.mxu0 0.0
    %280 = vmatpush.msra.mxu0 %v256
    %281 = vmatpush.msra.mxu0 %v254
    %282 = vmatpush.msra.mxu0 %v252
    %283 = vmatpush.msra.mxu0 %v250
    %284 = vmatmul.f32.gmra.mxu0 %v266
    %v285 = vpop.f32.mrf.mxu0
    %v286 = vadd.f32 %v263, %v285
    %287 = vdwg.mxu0
    %288 = vmatpush.msra.mxu0 0.0
    %289 = vmatpush.msra.mxu0 0.0
    %290 = vmatpush.msra.mxu0 0.0
    %291 = vmatpush.msra.mxu0 0.0
    %292 = vmatpush.msra.mxu0 0.0
    %293 = vmatpush.msra.mxu0 0.0
    %294 = vmatpush.msra.mxu0 0.0
    %295 = vmatpush.msra.mxu0 0.0
    %296 = vmatpush.msra.mxu0 0.0
    %297 = vmatpush.msra.mxu0 0.0
    %298 = vmatpush.msra.mxu0 0.0
    %299 = vmatpush.msra.mxu0 0.0
    %300 = vmatpush.msra.mxu0 %v257
    %301 = vmatpush.msra.mxu0 %v255
    %302 = vmatpush.msra.mxu0 %v253
    %303 = vmatpush.msra.mxu0 %v251
    %304 = vmatmul.f32.gmra.mxu0 %v266
    %v305 = vpop.f32.mrf.mxu0
    %v306 = vadd.f32 %v263, %v305
    %307 = vdwg.mxu0
    %vm308 = vcmp.le.f32.partialorder %v33, 0.0
    %vm309 = vcmp.ge.f32.partialorder %v33, 1.0
    %vm310 = vmor %vm308, %vm309
    %v311 = vsel %vm310, 1, 0
    %v312 = vrot.slane %v311, 7
    %v313 = vrot.slane %v312, 2
    %vm314 = vcmp.ne.s32.totalorder %v313, 0
    %vm315 = vmor %vm308, %vm314
    %vm316 = vcmp.lt.f32.partialorder %v33, 0.5
    %v317 = vld [vmem:[%s7] sm:$0xff]
    %v318 = vld [vmem:[%s8] sm:$0xff]
    %v319 = vsel %vm316, 1, 0
    %v320 = vperm.slane %v319, 1
    %v321 = vperm.slane %v319, 3
    %v322 = vperm.slane %v320, 1
    %v323 = vperm.slane %v321, 1
    %vm324 = vcmp.eq.s32.totalorder %v322, 1
    %vm325 = vcmp.eq.s32.totalorder %v323, 1
    %327 = vset.pattern.permute.xlu0 0
    %328 = vperm.xlu0 %327, %v317
    %v329 = vpop.permute.xlu0 %328
    %332 = vset.pattern.permute.xlu0 0
    %333 = vperm.xlu0 %332, %v318
    %v334 = vpop.permute.xlu0 %333
    %v336 = vsel %vm324, %v329, %v334
    %v337 = vsel %vm325, %v329, %v334
    %v338 = vsel %vm315, 1, 0
    %v339 = vperm.slane %v338, 0
    %v340 = vperm.slane %v338, 2
    %v341 = vperm.slane %v339, 0
    %v342 = vperm.slane %v340, 0
    %vm343 = vcmp.eq.s32.totalorder %v341, 1
    %vm344 = vcmp.eq.s32.totalorder %v342, 1
    %v345 = vsel %vm343, %v336, %v286
    %v346 = vsel %vm344, %v337, %v306
    %347 = vst [vmem:[#allocation2] sm:$0xff] %v345
    %348 = vst [vmem:[#allocation2 + $0x8] sm:$0xff] %v346
    // Predicated region
    $region38: #{brio_and_wu_pinn_forward.1} parent=1 // pred_check
      _
    $region39: #{brio_and_wu_pinn_forward.1} parent=1 // pred_check_branch
      %350 = sbr.rel (0) target = $region41
    $region40: #{brio_and_wu_pinn_forward.1} parent=1 // pred_region
      %352 = vsyncadd [#allocation3], 0
      %s354 = sshll.u32 [#allocation2], 4
      %s355 = int_to_ptr.vmem [resolvable:$true] %s354
      %s356 = sshll.u32 %s9, 4
      %s357 = int_to_ptr.hbm [resolvable:$true] %s356
      %359 = dma.vmem_to_hbm [thread:$0]  %s355, 256, %s357, [#allocation3]
    $region41: #{brio_and_wu_pinn_forward.1} parent=1 // pred_fallthru
      _
    // Predicated region
    $region42: #{brio_and_wu_pinn_forward.1} parent=1 // pred_check
      _
    $region43: #{brio_and_wu_pinn_forward.1} parent=1 // pred_check_branch
      %361 = sbr.rel (0) target = $region45
    $region44: #{brio_and_wu_pinn_forward.1} parent=1 // pred_region
      %363 = dma.done [#allocation3], 256
    $region45: #{brio_and_wu_pinn_forward.1} parent=1 // pred_fallthru
      _
    %364 = vsyncpa [#allocation3], 1

</llo_original>
